<compile_context>
chip_gen: v7x
topology: tpu7x:2x2x1
jax: 0.10.0
libtpu: 0.0.40
codegen_flags: <defaults>
</compile_context>

<pallas_src>
import jax
import jax.numpy as jnp
from jax.experimental import pallas as pl
from jax.experimental.pallas import tpu as pltpu

_MIB = 1024 * 1024
_MAX_LANES = 8192              # caps row_bytes at 32 KiB (f32) -> no VMEM blow-up
_SMALL_BYPASS_BYTES = _MIB     # below this, pallas launch overhead dominates


def _zero_mul_kernel(x_ref, o_ref):
    # Elementwise x * 0.0 — matches torch.mul(0.0) including NaN/Inf -> NaN.
    o_ref[...] = x_ref[...] * jnp.array(0.0, dtype=x_ref.dtype)


def _pick_lanes(total: int):
    """Largest divisor of `total` that is a multiple of 128 and <= _MAX_LANES."""
    best = None
    k = 128
    limit = min(total, _MAX_LANES)
    while k <= limit:
        if total % k == 0:
            best = k
        k += 128
    return best


def _target_block_bytes() -> int:
    """Per-buffer block size tuned per TPU generation (safe default otherwise)."""
    try:
        kind = jax.devices()[0].device_kind.lower()
    except Exception:  # pragma: no cover - defensive
        return 4 * _MIB
    if "v7" in kind:
        return 8 * _MIB   # ~3.2 TB/s per TC: big blocks amortize per-step overhead
    if "v5" in kind:
        return 2 * _MIB   # lower HBM BW; 2 MiB already <10% per-step overhead
    return 4 * _MIB       # v6e and default


def _zero_mul_pallas_2d(x2d):
    """Streaming x*0 over a lane-dense 2D array (rows, lanes), lanes % 128 == 0."""
    R, C = x2d.shape
    itemsize = jnp.dtype(x2d.dtype).itemsize
    sublane = max(8, 32 // itemsize)          # 8 f32 / 16 bf16 / 32 int8
    block_bytes = _target_block_bytes()
    row_bytes = C * itemsize

    # Rows per block, rounded down to the dtype's sublane-packing multiple.
    tile_r = max(sublane, (block_bytes // row_bytes // sublane) * sublane)
    if tile_r >= R:
        tile_r = R
    # Guarantee >= 2 grid steps so a "parallel" axis has work for both v7x TCs.
    if R > sublane and (R + tile_r - 1) // tile_r < 2:
        half = (R + 1) // 2
        tile_r = ((half + sublane - 1) // sublane) * sublane
        if tile_r >= R:
            tile_r = sublane

    grid_r = (R + tile_r - 1) // tile_r
    total_bytes = R * C * itemsize
    cost = pl.CostEstimate(
        flops=R * C, transcendentals=0, bytes_accessed=2 * total_bytes
    )
    # Enough scoped VMEM for in+out double buffering at the chosen block size,
    # but always comfortably below v7x's 64 MiB physical VMEM.
    vmem_limit = int(min(48 * _MIB, max(32 * _MIB, 6 * block_bytes)))

    return pl.pallas_call(
        _zero_mul_kernel,
        out_shape=jax.ShapeDtypeStruct((R, C), x2d.dtype),
        grid=(grid_r,),
        in_specs=[pl.BlockSpec((tile_r, C), lambda i: (i, 0))],
        out_specs=pl.BlockSpec((tile_r, C), lambda i: (i, 0)),
        compiler_params=pltpu.CompilerParams(
            dimension_semantics=("parallel",),
            vmem_limit_bytes=vmem_limit,
        ),
        cost_estimate=cost,
    )(x2d)


def zero_forward(x, stride: int, *, min_pallas_bytes: int = _SMALL_BYPASS_BYTES):
    """JAX/Pallas equivalent of Zero(stride).forward(x). x is NCHW."""
    if stride != 1:
        # Fused XLA slice*0.0: reads the strided input once and writes the
        # (1/stride^2-sized) output once.  Routing this through pallas_call
        # would force materializing the subsampled tensor first (custom calls
        # don't fuse), doubling HBM traffic for no benefit.
        return x[:, :, ::stride, ::stride] * jnp.array(0.0, dtype=x.dtype)

    total = int(x.size)
    total_bytes = total * jnp.dtype(x.dtype).itemsize
    lanes = _pick_lanes(total)
    if total_bytes < min_pallas_bytes or lanes is None:
        # Tiny tensors: pallas_call boundary/launch overhead dominates.
        # lanes is None: no multiple-of-128 factorization exists, so a Pallas
        # tiling would be lane-sparse; plain XLA hits the same HBM roofline.
        return x * jnp.array(0.0, dtype=x.dtype)

    out2d = _zero_mul_pallas_2d(x.reshape(total // lanes, lanes))
    return out2d.reshape(x.shape)


if __name__ == "__main__":
    k1, k2 = jax.random.split(jax.random.PRNGKey(0))

    # Small NCHW input consistent with the module (bypass path).
    x = jax.random.normal(k1, (2, 4, 16, 16), dtype=jnp.float32)

    out1 = zero_forward(x, stride=1)
    jax.block_until_ready(out1)
    assert out1.shape == (2, 4, 16, 16)
    assert bool(jnp.all(out1 == 0.0))

    out2 = zero_forward(x, stride=2)
    jax.block_until_ready(out2)
    assert out2.shape == (2, 4, 8, 8)
    assert bool(jnp.all(out2 == 0.0))

    # Force the Pallas kernel at the small shape (single full-array block).
    out3 = zero_forward(x, stride=1, min_pallas_bytes=0)
    jax.block_until_ready(out3)
    assert out3.shape == (2, 4, 16, 16)
    assert bool(jnp.all(out3 == 0.0))

    # Larger input takes the default Pallas path (>= 2 grid blocks so both
    # v7x TensorCores get work).
    x_big = jax.random.normal(k2, (8, 64, 32, 32), dtype=jnp.float32)  # 2 MiB
    out4 = zero_forward(x_big, stride=1)
    jax.block_until_ready(out4)
    assert out4.shape == (8, 64, 32, 32)
    assert bool(jnp.all(out4 == 0.0))

    # NaN propagation through the Pallas path (x.mul(0.0): NaN/Inf -> NaN).
    x_nan = x_big.at[3, 17, 5, 9].set(jnp.nan)
    out5 = zero_forward(x_nan, stride=1)
    jax.block_until_ready(out5)
    assert bool(jnp.isnan(out5[3, 17, 5, 9]))
    assert int(jnp.isnan(out5).sum()) == 1

    print("KERNEL_OK")
</pallas_src>

<mosaic_0001>
module attributes {stable_mosaic.version = 11 : i64} {
  func.func @_zero_mul_kernel(%arg0: i32, %arg1: memref<1x2048xf32, #tpu.memory_space<vmem>>, %arg2: memref<1x2048xf32, #tpu.memory_space<vmem>>) attributes {dimension_semantics = [#tpu.dimension_semantics<parallel>], iteration_bounds = array<i64: 1>, scalar_prefetch = 0 : i64, scratch_operands = 0 : i64, tpu.core_type = #tpu.core_type<tc>, window_params = [{transform_indices = @transform_0, window_bounds = array<i64: 1, 2048>}, {transform_indices = @transform_1, window_bounds = array<i64: 1, 2048>}]} {
    %c0 = arith.constant 0 : index
    %c0_0 = arith.constant 0 : index
    %0 = vector.load %arg1[%c0, %c0_0] : memref<1x2048xf32, #tpu.memory_space<vmem>>, vector<1x2048xf32>
    %cst = arith.constant 0.000000e+00 : f32
    %1 = vector.broadcast %cst : f32 to vector<1x2048xf32>
    %2 = arith.mulf %0, %1 : vector<1x2048xf32>
    %c0_1 = arith.constant 0 : index
    %c0_2 = arith.constant 0 : index
    %3 = vector.load %arg2[%c0_1, %c0_2] : memref<1x2048xf32, #tpu.memory_space<vmem>>, vector<1x2048xf32>
    tpu.vector_store %arg2[%c0_1, %c0_2], %2 {strides = array<i32>} : memref<1x2048xf32, #tpu.memory_space<vmem>>, vector<1x2048xf32>,
    return
  }
  func.func @transform_0(%arg0: i32) -> (i32, i32) {
    %c0_i32 = arith.constant 0 : i32
    %c0_i32_0 = arith.constant 0 : i32
    return %arg0, %c0_i32 : i32, i32
  }
  func.func @transform_1(%arg0: i32) -> (i32, i32) {
    %c0_i32 = arith.constant 0 : i32
    %c0_i32_0 = arith.constant 0 : i32
    return %arg0, %c0_i32 : i32, i32
  }
}

</mosaic_0001>

<llo_original>
// kernel: tpu_custom_call.1
$region0: #{tpu_custom_call.1}
  #allocation0 [shape = 'u32[]', space=smem, size = 0x4, offset = 0x4, fixed_abs, tag = 'smem constant byte address 0x4 - core index']
  #allocation1 [shape = 'u32[144,128]{1,0:T(1,128)}', space=vmem, size = 0x12000, scoped, tag = 'internal scratch']
  %s0 = inlined_call_operand.hbm [shape: f32[1,2048], index: 0, kind: input, shape index: {}]
  %s1 = inlined_call_operand.hbm [shape: f32[1,2048], index: 1, kind: output, shape index: {}]
  %s2 = sld [smem:[#allocation0]]
  $region18: #{tpu_custom_call.1} parent=0
    _
  %s4 = ssub.s32 1, %s2
  %s5 = scalar_select 0, %s4, %s2
  $region1: #{tpu_custom_call.1} parent=0
    #allocation2 [shape = 'u8[8192]{0}', space=vmem, size = 0x2000, scoped, tag = 'input window, operand 0, single buffered']
    #allocation3 [shape = 's32[1]{0}', space=sflag, size = 0x4, scoped, tag = 'scoped memory for tpu_custom_call.1']
    #allocation4 [shape = 's32[1]{0}', space=sflag, size = 0x4, scoped, tag = 'scoped memory for tpu_custom_call.1']
    #allocation5 [shape = 'u8[8192]{0}', space=vmem, size = 0x2000, scoped, tag = 'output window, operand 0, single buffered']
    %6 = vsyncpa [#allocation3], 0
    %7 = vsyncpa [#allocation4], 0
    // Predicated region
    $region2: #{tpu_custom_call.1} parent=1 // pred_check
      _
    $region3: #{tpu_custom_call.1} parent=1 // pred_check_branch
      %9 = sbr.rel (0) target = $region5
    $region4: #{tpu_custom_call.1} parent=1 // pred_region
      %s11 = ssub.s32 256, 256
      %12 = vsyncadd [#allocation3], %s11
      %s14 = sshll.u32 [#allocation2], 4
      %s15 = int_to_ptr.vmem [resolvable:$true] %s14
      %17 = dma.hbm_to_vmem [thread:$0]  %s0, 256, %s15, [#allocation3]
    $region5: #{tpu_custom_call.1} parent=1 // pred_fallthru
      _
    // Predicated region
    $region6: #{tpu_custom_call.1} parent=1 // pred_check
      _
    $region7: #{tpu_custom_call.1} parent=1 // pred_check_branch
      %19 = sbr.rel (0) target = $region9
    $region8: #{tpu_custom_call.1} parent=1 // pred_region
      %20 = dma.done [#allocation3], 256
    $region9: #{tpu_custom_call.1} parent=1 // pred_fallthru
      _
    %v21 = vld [vmem:[#allocation2] sm:$0xff]
    %v22 = vld [vmem:[#allocation2 + $0x8] sm:$0xff]
    %v23 = vmul.f32 %v21, 0.0
    %v24 = vmul.f32 %v22, 0.0
    %25 = vst [vmem:[#allocation5] sm:$0xff] %v23
    %26 = vst [vmem:[#allocation5 + $0x8] sm:$0xff] %v24
    // Predicated region
    $region10: #{tpu_custom_call.1} parent=1 // pred_check
      _
    $region11: #{tpu_custom_call.1} parent=1 // pred_check_branch
      %28 = sbr.rel (0) target = $region13
    $region12: #{tpu_custom_call.1} parent=1 // pred_region
      %s30 = ssub.s32 256, 256
      %31 = vsyncadd [#allocation4], %s30
      %s33 = sshll.u32 [#allocation5], 4
      %s34 = int_to_ptr.vmem [resolvable:$true] %s33
      %36 = dma.vmem_to_hbm [thread:$0]  %s34, 256, %s1, [#allocation4]
    $region13: #{tpu_custom_call.1} parent=1 // pred_fallthru
      _
    // Predicated region
    $region14: #{tpu_custom_call.1} parent=1 // pred_check
      _
    $region15: #{tpu_custom_call.1} parent=1 // pred_check_branch
      %38 = sbr.rel (0) target = $region17
    $region16: #{tpu_custom_call.1} parent=1 // pred_region
      %39 = dma.done [#allocation4], 256
    $region17: #{tpu_custom_call.1} parent=1 // pred_fallthru
      _
    %40 = vsyncpa [#allocation3], 1
    %41 = vsyncpa [#allocation4], 1

</llo_original>
